<compile_context>
chip_gen: v7x
topology: tpu7x:2x2x1
jax: 0.10.0
libtpu: 0.0.40
codegen_flags: <defaults>
</compile_context>

<pallas_src>
import jax
import jax.numpy as jnp
from jax.experimental import pallas as pl
from jax.experimental.pallas import tpu as pltpu


def simple_mle_kernel(ids_ref, m_ref, b1_ref, w2_ref, b2_ref, out_ref):
    # ids_ref : (B, S)    int32, VMEM
    # m_ref   : (S*V, H)  bf16,  VMEM   (folded emb + linear1 weight)
    # b1_ref  : (1, H)    f32,   VMEM
    # w2_ref  : (H, T)    bf16,  VMEM
    # b2_ref  : (1, T)    f32,   VMEM
    # out_ref : (B, T)    f32,   VMEM
    B, S = ids_ref.shape
    SV, H = m_ref.shape
    V = SV // S

    ids = ids_ref[...]                                        # single vector load
    col = jax.lax.broadcasted_iota(jnp.int32, (B, SV), 1)     # 0..S*V-1 along lanes

    # One-hot (B, S*V): onehot[b, s*V + ids[b, s]] = 1.  Static unroll over S
    # (tiny), all work is lane-parallel VPU compares/ORs — no scalar gather.
    onehot_bool = None
    for s in range(S):
        t = ids[:, s:s + 1] + s * V                           # (B, 1), lane-broadcast
        eq = col == t
        onehot_bool = eq if onehot_bool is None else jnp.logical_or(onehot_bool, eq)
    onehot = jnp.where(onehot_bool, 1.0, 0.0).astype(m_ref.dtype)   # (B, S*V) bf16

    # embedding + flatten + linear1 as one MXU matmul (f32 accumulation).
    h = jnp.dot(onehot, m_ref[...], preferred_element_type=jnp.float32) + b1_ref[...]
    h = jnp.maximum(h, 0.0)                                   # ReLU, f32 VPU
    out = jnp.dot(h.astype(w2_ref.dtype), w2_ref[...],
                  preferred_element_type=jnp.float32) + b2_ref[...]
    out_ref[...] = out.astype(out_ref.dtype)


def simple_mle_forward(sentence_ids, emb_table, w1, b1, w2, b2,
                       *, compute_dtype=jnp.bfloat16):
    """Forward pass matching SimpleMLEModel.forward.

    sentence_ids : (B, S) int32
    emb_table    : (V, E) f32
    w1           : (S*E, H), b1: (H,)   (stored transposed vs nn.Linear: (in, out))
    w2           : (H, T),   b2: (T,)
    returns      : (B, T) f32
    """
    B, S = sentence_ids.shape
    V, E = emb_table.shape
    SE, H = w1.shape
    T = w2.shape[1]
    assert SE == S * E, "w1 input dim must equal sen_size * embedding_dim"

    # Weight prep: fold embedding table into linear1.
    #   M[s*V + v, :] = emb[v, :] @ w1[s*E:(s+1)*E, :]
    # (In a real deployment this is computed once at weight-load time.)
    m = jnp.einsum(
        've,seh->svh',
        emb_table.astype(jnp.float32),
        w1.reshape(S, E, H).astype(jnp.float32),
        precision=jax.lax.Precision.HIGHEST,
    ).reshape(S * V, H)

    ids = jnp.clip(sentence_ids.astype(jnp.int32), 0, V - 1)

    out = pl.pallas_call(
        simple_mle_kernel,
        out_shape=jax.ShapeDtypeStruct((B, T), jnp.float32),
        in_specs=[
            pl.BlockSpec(memory_space=pltpu.MemorySpace.VMEM),   # ids (vector compare path)
            pl.BlockSpec(memory_space=pltpu.MemorySpace.VMEM),   # folded M
            pl.BlockSpec(memory_space=pltpu.MemorySpace.VMEM),   # b1
            pl.BlockSpec(memory_space=pltpu.MemorySpace.VMEM),   # w2
            pl.BlockSpec(memory_space=pltpu.MemorySpace.VMEM),   # b2
        ],
        out_specs=pl.BlockSpec(memory_space=pltpu.MemorySpace.VMEM),
    )(
        ids,
        m.astype(compute_dtype),
        b1.reshape(1, H).astype(jnp.float32),
        w2.astype(compute_dtype),
        b2.reshape(1, T).astype(jnp.float32),
    )
    return out


if __name__ == "__main__":
    # Small shapes consistent with the module's __init__ signature.
    vocab_size = 32
    tagset_size = 8
    sen_size = 8
    embedding_dim = 16
    hidden_dim = 32
    batch = 16   # bf16 MXU LHS fills packed sublanes

    key = jax.random.PRNGKey(0)
    k_emb, k_w1, k_b1, k_w2, k_b2, k_sent = jax.random.split(key, 6)

    emb_table = jax.random.normal(k_emb, (vocab_size, embedding_dim), jnp.float32)
    # nn.Linear stores (out, in); here weights are stored transposed: (in, out).
    w1 = jax.random.normal(k_w1, (embedding_dim * sen_size, hidden_dim), jnp.float32) * 0.1
    b1 = jax.random.normal(k_b1, (hidden_dim,), jnp.float32) * 0.1
    w2 = jax.random.normal(k_w2, (hidden_dim, tagset_size), jnp.float32) * 0.1
    b2 = jax.random.normal(k_b2, (tagset_size,), jnp.float32) * 0.1

    sentence_ids = jax.random.randint(
        k_sent, (batch, sen_size), 0, vocab_size, dtype=jnp.int32
    )

    fwd = jax.jit(simple_mle_forward)
    out = jax.block_until_ready(fwd(sentence_ids, emb_table, w1, b1, w2, b2))

    # Precision-matched reference (same folded-M bf16-input / f32-accumulate math).
    m_f32 = jnp.einsum(
        've,seh->svh', emb_table,
        w1.reshape(sen_size, embedding_dim, hidden_dim),
        precision=jax.lax.Precision.HIGHEST,
    ).reshape(sen_size * vocab_size, hidden_dim)
    m_rt = m_f32.astype(jnp.bfloat16).astype(jnp.float32)
    flat_idx = (jnp.arange(sen_size) * vocab_size)[None, :] + sentence_ids   # (B, S)
    h_ref = jnp.take(m_rt, flat_idx, axis=0).sum(axis=1) + b1
    h_ref = jnp.maximum(h_ref, 0.0)
    ref = jnp.dot(h_ref.astype(jnp.bfloat16), w2.astype(jnp.bfloat16),
                  preferred_element_type=jnp.float32) + b2

    # Pure-f32 reference of the original PyTorch forward (fidelity sanity check;
    # difference is the intentional bf16 MXU-input tradeoff).
    x_f32 = jnp.take(emb_table, sentence_ids, axis=0).reshape(batch, -1)
    ref_f32 = jnp.maximum(x_f32 @ w1 + b1, 0.0) @ w2 + b2

    assert out.shape == (batch, tagset_size)
    assert jnp.allclose(out, ref, atol=1e-2, rtol=1e-2), float(jnp.max(jnp.abs(out - ref)))
    assert jnp.allclose(out, ref_f32, atol=1e-1, rtol=1e-1), float(jnp.max(jnp.abs(out - ref_f32)))

    print("KERNEL_OK")
</pallas_src>

<mosaic_0001>
module attributes {stable_mosaic.version = 11 : i64} {
  func.func @simple_mle_kernel(%arg0: memref<16x8xi32, #tpu.memory_space<vmem>>, %arg1: memref<256x32xbf16, #tpu.memory_space<vmem>>, %arg2: memref<1x32xf32, #tpu.memory_space<vmem>>, %arg3: memref<32x8xbf16, #tpu.memory_space<vmem>>, %arg4: memref<1x8xf32, #tpu.memory_space<vmem>>, %arg5: memref<16x8xf32, #tpu.memory_space<vmem>>) attributes {dimension_semantics = [], scalar_prefetch = 0 : i64, scratch_operands = 0 : i64, tpu.core_type = #tpu.core_type<tc>} {
    %c0 = arith.constant 0 : index
    %c0_0 = arith.constant 0 : index
    %0 = vector.load %arg0[%c0, %c0_0] : memref<16x8xi32, #tpu.memory_space<vmem>>, vector<16x8xi32>
    %1 = tpu.iota {dimensions = array<i32: 1>} : vector<16x256xi32>
    %2 = vector.extract_strided_slice %0 {offsets = [0, 0], sizes = [16, 1], strides = [1, 1]} : vector<16x8xi32> to vector<16x1xi32>
    %c0_i32 = arith.constant 0 : i32
    %3 = vector.broadcast %c0_i32 : i32 to vector<16x1xi32>
    %4 = arith.addi %2, %3 : vector<16x1xi32>
    %5 = vector.broadcast %4 : vector<16x1xi32> to vector<16x256xi32>
    %6 = arith.cmpi eq, %1, %5 : vector<16x256xi32>
    %7 = vector.extract_strided_slice %0 {offsets = [0, 1], sizes = [16, 1], strides = [1, 1]} : vector<16x8xi32> to vector<16x1xi32>
    %c32_i32 = arith.constant 32 : i32
    %8 = vector.broadcast %c32_i32 : i32 to vector<16x1xi32>
    %9 = arith.addi %7, %8 : vector<16x1xi32>
    %10 = vector.broadcast %9 : vector<16x1xi32> to vector<16x256xi32>
    %11 = arith.cmpi eq, %1, %10 : vector<16x256xi32>
    %12 = arith.ori %6, %11 : vector<16x256xi1>
    %13 = vector.extract_strided_slice %0 {offsets = [0, 2], sizes = [16, 1], strides = [1, 1]} : vector<16x8xi32> to vector<16x1xi32>
    %c64_i32 = arith.constant 64 : i32
    %14 = vector.broadcast %c64_i32 : i32 to vector<16x1xi32>
    %15 = arith.addi %13, %14 : vector<16x1xi32>
    %16 = vector.broadcast %15 : vector<16x1xi32> to vector<16x256xi32>
    %17 = arith.cmpi eq, %1, %16 : vector<16x256xi32>
    %18 = arith.ori %12, %17 : vector<16x256xi1>
    %19 = vector.extract_strided_slice %0 {offsets = [0, 3], sizes = [16, 1], strides = [1, 1]} : vector<16x8xi32> to vector<16x1xi32>
    %c96_i32 = arith.constant 96 : i32
    %20 = vector.broadcast %c96_i32 : i32 to vector<16x1xi32>
    %21 = arith.addi %19, %20 : vector<16x1xi32>
    %22 = vector.broadcast %21 : vector<16x1xi32> to vector<16x256xi32>
    %23 = arith.cmpi eq, %1, %22 : vector<16x256xi32>
    %24 = arith.ori %18, %23 : vector<16x256xi1>
    %25 = vector.extract_strided_slice %0 {offsets = [0, 4], sizes = [16, 1], strides = [1, 1]} : vector<16x8xi32> to vector<16x1xi32>
    %c128_i32 = arith.constant 128 : i32
    %26 = vector.broadcast %c128_i32 : i32 to vector<16x1xi32>
    %27 = arith.addi %25, %26 : vector<16x1xi32>
    %28 = vector.broadcast %27 : vector<16x1xi32> to vector<16x256xi32>
    %29 = arith.cmpi eq, %1, %28 : vector<16x256xi32>
    %30 = arith.ori %24, %29 : vector<16x256xi1>
    %31 = vector.extract_strided_slice %0 {offsets = [0, 5], sizes = [16, 1], strides = [1, 1]} : vector<16x8xi32> to vector<16x1xi32>
    %c160_i32 = arith.constant 160 : i32
    %32 = vector.broadcast %c160_i32 : i32 to vector<16x1xi32>
    %33 = arith.addi %31, %32 : vector<16x1xi32>
    %34 = vector.broadcast %33 : vector<16x1xi32> to vector<16x256xi32>
    %35 = arith.cmpi eq, %1, %34 : vector<16x256xi32>
    %36 = arith.ori %30, %35 : vector<16x256xi1>
    %37 = vector.extract_strided_slice %0 {offsets = [0, 6], sizes = [16, 1], strides = [1, 1]} : vector<16x8xi32> to vector<16x1xi32>
    %c192_i32 = arith.constant 192 : i32
    %38 = vector.broadcast %c192_i32 : i32 to vector<16x1xi32>
    %39 = arith.addi %37, %38 : vector<16x1xi32>
    %40 = vector.broadcast %39 : vector<16x1xi32> to vector<16x256xi32>
    %41 = arith.cmpi eq, %1, %40 : vector<16x256xi32>
    %42 = arith.ori %36, %41 : vector<16x256xi1>
    %43 = vector.extract_strided_slice %0 {offsets = [0, 7], sizes = [16, 1], strides = [1, 1]} : vector<16x8xi32> to vector<16x1xi32>
    %c224_i32 = arith.constant 224 : i32
    %44 = vector.broadcast %c224_i32 : i32 to vector<16x1xi32>
    %45 = arith.addi %43, %44 : vector<16x1xi32>
    %46 = vector.broadcast %45 : vector<16x1xi32> to vector<16x256xi32>
    %47 = arith.cmpi eq, %1, %46 : vector<16x256xi32>
    %48 = arith.ori %42, %47 : vector<16x256xi1>
    %cst = arith.constant 1.000000e+00 : f32
    %cst_1 = arith.constant 0.000000e+00 : f32
    %49 = vector.broadcast %cst : f32 to vector<16x256xf32>
    %50 = vector.broadcast %cst_1 : f32 to vector<16x256xf32>
    %51 = arith.select %48, %49, %50 : vector<16x256xi1>, vector<16x256xf32>
    %52 = arith.truncf %51 : vector<16x256xf32> to vector<16x256xbf16>
    %c0_2 = arith.constant 0 : index
    %c0_3 = arith.constant 0 : index
    %53 = vector.load %arg1[%c0_2, %c0_3] : memref<256x32xbf16, #tpu.memory_space<vmem>>, vector<256x32xbf16>
    %cst_4 = arith.constant dense<0.000000e+00> : vector<16x32xf32>
    %54 = tpu.matmul %52, %53, %cst_4 {dimension_numbers = #tpu.dot_dimension_numbers<[1], [0], [0], [1], [0, 0, 1, 1], [], []>} : vector<16x256xbf16>, vector<256x32xbf16>, vector<16x32xf32> -> vector<16x32xf32>
    %c0_5 = arith.constant 0 : index
    %c0_6 = arith.constant 0 : index
    %55 = vector.load %arg2[%c0_5, %c0_6] : memref<1x32xf32, #tpu.memory_space<vmem>>, vector<1x32xf32>
    %56 = vector.broadcast %55 : vector<1x32xf32> to vector<16x32xf32>
    %57 = arith.addf %54, %56 : vector<16x32xf32>
    %cst_7 = arith.constant 0.000000e+00 : f32
    %58 = vector.broadcast %cst_7 : f32 to vector<16x32xf32>
    %59 = arith.maximumf %57, %58 : vector<16x32xf32>
    %60 = arith.truncf %59 : vector<16x32xf32> to vector<16x32xbf16>
    %c0_8 = arith.constant 0 : index
    %c0_9 = arith.constant 0 : index
    %61 = vector.load %arg3[%c0_8, %c0_9] : memref<32x8xbf16, #tpu.memory_space<vmem>>, vector<32x8xbf16>
    %cst_10 = arith.constant dense<0.000000e+00> : vector<16x8xf32>
    %62 = tpu.matmul %60, %61, %cst_10 {dimension_numbers = #tpu.dot_dimension_numbers<[1], [0], [0], [1], [0, 0, 1, 1], [], []>} : vector<16x32xbf16>, vector<32x8xbf16>, vector<16x8xf32> -> vector<16x8xf32>
    %c0_11 = arith.constant 0 : index
    %c0_12 = arith.constant 0 : index
    %63 = vector.load %arg4[%c0_11, %c0_12] : memref<1x8xf32, #tpu.memory_space<vmem>>, vector<1x8xf32>
    %64 = vector.broadcast %63 : vector<1x8xf32> to vector<16x8xf32>
    %65 = arith.addf %62, %64 : vector<16x8xf32>
    %c0_13 = arith.constant 0 : index
    %c0_14 = arith.constant 0 : index
    %66 = vector.load %arg5[%c0_13, %c0_14] : memref<16x8xf32, #tpu.memory_space<vmem>>, vector<16x8xf32>
    tpu.vector_store %arg5[%c0_13, %c0_14], %65 {strides = array<i32>} : memref<16x8xf32, #tpu.memory_space<vmem>>, vector<16x8xf32>,
    return
  }
}

</mosaic_0001>

<llo_original>
// kernel: simple_mle_forward.1
$region0: #{simple_mle_forward.1}
  #allocation0 [shape = 'u32[]', space=smem, size = 0x4, offset = 0x4, fixed_abs, tag = 'smem constant byte address 0x4 - core index']
  #allocation1 [shape = 'u32[144,128]{1,0:T(1,128)}', space=vmem, size = 0x12000, scoped, tag = 'internal scratch']
  %s0 = inlined_call_operand.vmem [shape: s32[16,8], index: 0, kind: input, shape index: {}]
  %s1 = inlined_call_operand.vmem [shape: bf16[256,32], index: 1, kind: input, shape index: {}]
  %s2 = inlined_call_operand.vmem [shape: f32[1,32], index: 2, kind: input, shape index: {}]
  %s3 = inlined_call_operand.vmem [shape: bf16[32,8], index: 3, kind: input, shape index: {}]
  %s4 = inlined_call_operand.vmem [shape: f32[1,8], index: 4, kind: input, shape index: {}]
  %s5 = inlined_call_operand.vmem [shape: f32[16,8], index: 5, kind: output, shape index: {}]
  %s6 = sld [smem:[#allocation0]]
  $region30: #{simple_mle_forward.1} parent=0
    _
  %s8 = ssub.s32 1, %s6
  %s9 = scalar_select 0, %s8, %s6
  // Predicated region
  $region2: #{simple_mle_forward.1} parent=0 // pred_check
    _
  $region3: #{simple_mle_forward.1} parent=0 // pred_check_branch
    %11 = sbr.rel (0) target = $region5
  $region4: #{simple_mle_forward.1} parent=0 // pred_region
    _
  $region5: #{simple_mle_forward.1} parent=0 // pred_fallthru
    _
  // Predicated region
  $region6: #{simple_mle_forward.1} parent=0 // pred_check
    _
  $region7: #{simple_mle_forward.1} parent=0 // pred_check_branch
    %13 = sbr.rel (0) target = $region9
  $region8: #{simple_mle_forward.1} parent=0 // pred_region
    _
  $region9: #{simple_mle_forward.1} parent=0 // pred_fallthru
    _
  // Predicated region
  $region10: #{simple_mle_forward.1} parent=0 // pred_check
    _
  $region11: #{simple_mle_forward.1} parent=0 // pred_check_branch
    %15 = sbr.rel (0) target = $region13
  $region12: #{simple_mle_forward.1} parent=0 // pred_region
    _
  $region13: #{simple_mle_forward.1} parent=0 // pred_fallthru
    _
  // Predicated region
  $region14: #{simple_mle_forward.1} parent=0 // pred_check
    _
  $region15: #{simple_mle_forward.1} parent=0 // pred_check_branch
    %17 = sbr.rel (0) target = $region17
  $region16: #{simple_mle_forward.1} parent=0 // pred_region
    _
  $region17: #{simple_mle_forward.1} parent=0 // pred_fallthru
    _
  // Predicated region
  $region18: #{simple_mle_forward.1} parent=0 // pred_check
    _
  $region19: #{simple_mle_forward.1} parent=0 // pred_check_branch
    %19 = sbr.rel (0) target = $region21
  $region20: #{simple_mle_forward.1} parent=0 // pred_region
    _
  $region21: #{simple_mle_forward.1} parent=0 // pred_fallthru
    _
  %v21 = vld [vmem:[%s0] sm:$0xff]
  %v22 = vld [vmem:[%s0 + $0x8] sm:$0xff]
  %v23 = vlaneseq
  %v24 = vand.u32 %v23, 127
  %v25 = vadd.s32 %v24, 128
  %26 = vset.pattern.permute.xlu0 0
  %27 = vperm.xlu0 %26, %v21
  %v28 = vpop.permute.xlu0 %27
  %29 = vset.pattern.permute.xlu0 0
  %30 = vperm.xlu0 %29, %v22
  %v31 = vpop.permute.xlu0 %30
  %vm32 = vcmp.eq.s32.totalorder %v24, %v28
  %vm33 = vcmp.eq.s32.totalorder %v25, %v28
  %vm34 = vcmp.eq.s32.totalorder %v24, %v31
  %vm35 = vcmp.eq.s32.totalorder %v25, %v31
  %v36 = vadd.s32 %v21, 32
  %v37 = vadd.s32 %v22, 32
  %38 = vset.pattern.permute.xlu0 1
  %39 = vperm.xlu0 %38, %v36
  %v40 = vpop.permute.xlu0 %39
  %41 = vset.pattern.permute.xlu0 1
  %42 = vperm.xlu0 %41, %v37
  %v43 = vpop.permute.xlu0 %42
  %vm44 = vcmp.eq.s32.totalorder %v24, %v40
  %vm45 = vcmp.eq.s32.totalorder %v25, %v40
  %vm46 = vcmp.eq.s32.totalorder %v24, %v43
  %vm47 = vcmp.eq.s32.totalorder %v25, %v43
  %vm48 = vmor %vm32, %vm44
  %vm49 = vmor %vm33, %vm45
  %vm50 = vmor %vm34, %vm46
  %vm51 = vmor %vm35, %vm47
  %v52 = vadd.s32 %v21, 64
  %v53 = vadd.s32 %v22, 64
  %54 = vset.pattern.permute.xlu0 2
  %55 = vperm.xlu0 %54, %v52
  %v56 = vpop.permute.xlu0 %55
  %57 = vset.pattern.permute.xlu0 2
  %58 = vperm.xlu0 %57, %v53
  %v59 = vpop.permute.xlu0 %58
  %vm60 = vcmp.eq.s32.totalorder %v24, %v56
  %vm61 = vcmp.eq.s32.totalorder %v25, %v56
  %vm62 = vcmp.eq.s32.totalorder %v24, %v59
  %vm63 = vcmp.eq.s32.totalorder %v25, %v59
  %vm64 = vmor %vm48, %vm60
  %vm65 = vmor %vm49, %vm61
  %vm66 = vmor %vm50, %vm62
  %vm67 = vmor %vm51, %vm63
  %v68 = vadd.s32 %v21, 96
  %v69 = vadd.s32 %v22, 96
  %70 = vset.pattern.permute.xlu0 3
  %71 = vperm.xlu0 %70, %v68
  %v72 = vpop.permute.xlu0 %71
  %73 = vset.pattern.permute.xlu0 3
  %74 = vperm.xlu0 %73, %v69
  %v75 = vpop.permute.xlu0 %74
  %vm76 = vcmp.eq.s32.totalorder %v24, %v72
  %vm77 = vcmp.eq.s32.totalorder %v25, %v72
  %vm78 = vcmp.eq.s32.totalorder %v24, %v75
  %vm79 = vcmp.eq.s32.totalorder %v25, %v75
  %vm80 = vmor %vm64, %vm76
  %vm81 = vmor %vm65, %vm77
  %vm82 = vmor %vm66, %vm78
  %vm83 = vmor %vm67, %vm79
  %v84 = vadd.s32 %v21, 128
  %v85 = vadd.s32 %v22, 128
  %86 = vset.pattern.permute.xlu0 4
  %87 = vperm.xlu0 %86, %v84
  %v88 = vpop.permute.xlu0 %87
  %89 = vset.pattern.permute.xlu0 4
  %90 = vperm.xlu0 %89, %v85
  %v91 = vpop.permute.xlu0 %90
  %vm92 = vcmp.eq.s32.totalorder %v24, %v88
  %vm93 = vcmp.eq.s32.totalorder %v25, %v88
  %vm94 = vcmp.eq.s32.totalorder %v24, %v91
  %vm95 = vcmp.eq.s32.totalorder %v25, %v91
  %vm96 = vmor %vm80, %vm92
  %vm97 = vmor %vm81, %vm93
  %vm98 = vmor %vm82, %vm94
  %vm99 = vmor %vm83, %vm95
  %v100 = vadd.s32 %v21, 160
  %v101 = vadd.s32 %v22, 160
  %102 = vset.pattern.permute.xlu0 5
  %103 = vperm.xlu0 %102, %v100
  %v104 = vpop.permute.xlu0 %103
  %105 = vset.pattern.permute.xlu0 5
  %106 = vperm.xlu0 %105, %v101
  %v107 = vpop.permute.xlu0 %106
  %vm108 = vcmp.eq.s32.totalorder %v24, %v104
  %vm109 = vcmp.eq.s32.totalorder %v25, %v104
  %vm110 = vcmp.eq.s32.totalorder %v24, %v107
  %vm111 = vcmp.eq.s32.totalorder %v25, %v107
  %vm112 = vmor %vm96, %vm108
  %vm113 = vmor %vm97, %vm109
  %vm114 = vmor %vm98, %vm110
  %vm115 = vmor %vm99, %vm111
  %v116 = vadd.s32 %v21, 192
  %v117 = vadd.s32 %v22, 192
  %118 = vset.pattern.permute.xlu0 6
  %119 = vperm.xlu0 %118, %v116
  %v120 = vpop.permute.xlu0 %119
  %121 = vset.pattern.permute.xlu0 6
  %122 = vperm.xlu0 %121, %v117
  %v123 = vpop.permute.xlu0 %122
  %vm124 = vcmp.eq.s32.totalorder %v24, %v120
  %vm125 = vcmp.eq.s32.totalorder %v25, %v120
  %vm126 = vcmp.eq.s32.totalorder %v24, %v123
  %vm127 = vcmp.eq.s32.totalorder %v25, %v123
  %vm128 = vmor %vm112, %vm124
  %vm129 = vmor %vm113, %vm125
  %vm130 = vmor %vm114, %vm126
  %vm131 = vmor %vm115, %vm127
  %v132 = vadd.s32 %v21, 224
  %v133 = vadd.s32 %v22, 224
  %134 = vset.pattern.permute.xlu0 7
  %135 = vperm.xlu0 %134, %v132
  %v136 = vpop.permute.xlu0 %135
  %137 = vset.pattern.permute.xlu0 7
  %138 = vperm.xlu0 %137, %v133
  %v139 = vpop.permute.xlu0 %138
  %vm140 = vcmp.eq.s32.totalorder %v24, %v136
  %vm141 = vcmp.eq.s32.totalorder %v25, %v136
  %vm142 = vcmp.eq.s32.totalorder %v24, %v139
  %vm143 = vcmp.eq.s32.totalorder %v25, %v139
  %vm144 = vmor %vm128, %vm140
  %vm145 = vmor %vm129, %vm141
  %vm146 = vmor %vm130, %vm142
  %vm147 = vmor %vm131, %vm143
  %v148 = vsel %vm144, 1.0, 0.0
  %v149 = vsel %vm145, 1.0, 0.0
  %v150 = vsel %vm146, 1.0, 0.0
  %v151 = vsel %vm147, 1.0, 0.0
  %v152 = vpack.c.bf16 %v150, %v148
  %v153 = vpack.c.bf16 %v151, %v149
  %v154 = vld [vmem:[%s1] sm:$0xf]
  %v155 = vld [vmem:[%s1 + $0x4] sm:$0xf]
  %v156 = vld [vmem:[%s1 + $0x8] sm:$0xf]
  %v157 = vld [vmem:[%s1 + $0xc] sm:$0xf]
  %v158 = vld [vmem:[%s1 + $0x10] sm:$0xf]
  %v159 = vld [vmem:[%s1 + $0x14] sm:$0xf]
  %v160 = vld [vmem:[%s1 + $0x18] sm:$0xf]
  %v161 = vld [vmem:[%s1 + $0x1c] sm:$0xf]
  %v162 = vld [vmem:[%s1 + $0x20] sm:$0xf]
  %v163 = vld [vmem:[%s1 + $0x24] sm:$0xf]
  %v164 = vld [vmem:[%s1 + $0x28] sm:$0xf]
  %v165 = vld [vmem:[%s1 + $0x2c] sm:$0xf]
  %v166 = vld [vmem:[%s1 + $0x30] sm:$0xf]
  %v167 = vld [vmem:[%s1 + $0x34] sm:$0xf]
  %v168 = vld [vmem:[%s1 + $0x38] sm:$0xf]
  %v169 = vld [vmem:[%s1 + $0x3c] sm:$0xf]
  %v170 = vld [vmem:[%s1 + $0x40] sm:$0xf]
  %v171 = vld [vmem:[%s1 + $0x44] sm:$0xf]
  %v172 = vld [vmem:[%s1 + $0x48] sm:$0xf]
  %v173 = vld [vmem:[%s1 + $0x4c] sm:$0xf]
  %v174 = vld [vmem:[%s1 + $0x50] sm:$0xf]
  %v175 = vld [vmem:[%s1 + $0x54] sm:$0xf]
  %v176 = vld [vmem:[%s1 + $0x58] sm:$0xf]
  %v177 = vld [vmem:[%s1 + $0x5c] sm:$0xf]
  %v178 = vld [vmem:[%s1 + $0x60] sm:$0xf]
  %v179 = vld [vmem:[%s1 + $0x64] sm:$0xf]
  %v180 = vld [vmem:[%s1 + $0x68] sm:$0xf]
  %v181 = vld [vmem:[%s1 + $0x6c] sm:$0xf]
  %v182 = vld [vmem:[%s1 + $0x70] sm:$0xf]
  %v183 = vld [vmem:[%s1 + $0x74] sm:$0xf]
  %v184 = vld [vmem:[%s1 + $0x78] sm:$0xf]
  %v185 = vld [vmem:[%s1 + $0x7c] sm:$0xf]
  %v186 = vld [vmem:[%s2] sm:$0x1]
  %v188 = vlaneseq
  %v189 = vshrl.u32 %v188, 7
  %v190 = vsub.s32 0, %v189
  %v191 = vrot.slane %v186, %v190
  %v225 = vunpack.c.l.b16 %v154
  %v226 = vunpack.c.l.b16 %v155
  %v227 = vunpack.c.l.b16 %v156
  %v228 = vunpack.c.l.b16 %v157
  %v229 = vunpack.c.l.b16 %v158
  %v230 = vunpack.c.l.b16 %v159
  %v231 = vunpack.c.l.b16 %v160
  %v232 = vunpack.c.l.b16 %v161
  %v233 = vunpack.c.l.b16 %v162
  %v234 = vunpack.c.l.b16 %v163
  %v235 = vunpack.c.l.b16 %v164
  %v236 = vunpack.c.l.b16 %v165
  %v237 = vunpack.c.l.b16 %v166
  %v238 = vunpack.c.l.b16 %v167
  %v239 = vunpack.c.l.b16 %v168
  %v240 = vunpack.c.l.b16 %v169
  %v241 = vunpack.c.l.b16 %v170
  %v242 = vunpack.c.l.b16 %v171
  %v243 = vunpack.c.l.b16 %v172
  %v244 = vunpack.c.l.b16 %v173
  %v245 = vunpack.c.l.b16 %v174
  %v246 = vunpack.c.l.b16 %v175
  %v247 = vunpack.c.l.b16 %v176
  %v248 = vunpack.c.l.b16 %v177
  %v249 = vunpack.c.l.b16 %v178
  %v250 = vunpack.c.l.b16 %v179
  %v251 = vunpack.c.l.b16 %v180
  %v252 = vunpack.c.l.b16 %v181
  %v253 = vunpack.c.l.b16 %v182
  %v254 = vunpack.c.l.b16 %v183
  %v255 = vunpack.c.l.b16 %v184
  %v256 = vunpack.c.l.b16 %v185
  %v257 = vpack.c.b16 %v226, %v225
  %v258 = vpack.c.b16 %v228, %v227
  %v259 = vpack.c.b16 %v230, %v229
  %v260 = vpack.c.b16 %v232, %v231
  %v261 = vpack.c.b16 %v234, %v233
  %v262 = vpack.c.b16 %v236, %v235
  %v263 = vpack.c.b16 %v238, %v237
  %v264 = vpack.c.b16 %v240, %v239
  %v265 = vpack.c.b16 %v242, %v241
  %v266 = vpack.c.b16 %v244, %v243
  %v267 = vpack.c.b16 %v246, %v245
  %v268 = vpack.c.b16 %v248, %v247
  %v269 = vpack.c.b16 %v250, %v249
  %v270 = vpack.c.b16 %v252, %v251
  %v271 = vpack.c.b16 %v254, %v253
  %v272 = vpack.c.b16 %v256, %v255
  %289 = vmatprep.subr.bf16.mxu0 0
  %290 = vmatpush1.bf16.msra.mxu0 %v257
  %291 = vmatprep.subr.bf16.mxu0 0
  %292 = vmatpush1.bf16.msra.mxu0 %v258
  %293 = vmatprep.subr.bf16.mxu0 0
  %294 = vmatpush1.bf16.msra.mxu0 %v259
  %295 = vmatprep.subr.bf16.mxu0 0
  %296 = vmatpush1.bf16.msra.mxu0 %v260
  %297 = vmatprep.subr.bf16.mxu0 0
  %298 = vmatpush1.bf16.msra.mxu0 %v261
  %299 = vmatprep.subr.bf16.mxu0 0
  %300 = vmatpush1.bf16.msra.mxu0 %v262
  %301 = vmatprep.subr.bf16.mxu0 0
  %302 = vmatpush1.bf16.msra.mxu0 %v263
  %303 = vmatprep.subr.bf16.mxu0 0
  %304 = vmatpush1.bf16.msra.mxu0 %v264
  %305 = vmatprep.subr.bf16.mxu0 0
  %306 = vmatpush1.bf16.msra.mxu0 %v265
  %307 = vmatprep.subr.bf16.mxu0 0
  %308 = vmatpush1.bf16.msra.mxu0 %v266
  %309 = vmatprep.subr.bf16.mxu0 0
  %310 = vmatpush1.bf16.msra.mxu0 %v267
  %311 = vmatprep.subr.bf16.mxu0 0
  %312 = vmatpush1.bf16.msra.mxu0 %v268
  %313 = vmatprep.subr.bf16.mxu0 0
  %314 = vmatpush1.bf16.msra.mxu0 %v269
  %315 = vmatprep.subr.bf16.mxu0 0
  %316 = vmatpush1.bf16.msra.mxu0 %v270
  %317 = vmatprep.subr.bf16.mxu0 0
  %318 = vmatpush1.bf16.msra.mxu0 %v271
  %319 = vmatprep.subr.bf16.mxu0 0
  %320 = vmatpush1.bf16.msra.mxu0 %v272
  %321 = vmatprep.mubr.bf16.mxu0 %v153
  %322 = vmatmul.mubr.bf16.gmra.mrb[0].mxu0 %v152
  %v323 = vpop.f32.mrb[0].mxu0
  %v324 = vadd.f32 %v191, %v323
  %v325 = vpop.f32.mrb[0].mxu0
  %v326 = vpop.f32.mrb[0].mxu0
  %v327 = vadd.f32 %v191, %v326
  %v328 = vpop.f32.mrb[0].mxu0
  %329 = vdwg.mxu0
  %v330 = vmax.f32 %v324, 0.0
  %v331 = vmax.f32 %v327, 0.0
  %v332 = vpack.c.bf16 %v331, %v330
  %v333 = vld [vmem:[%s3] sm:$0xf]
  %v334 = vld [vmem:[%s3 + $0x4] sm:$0xf]
  %v335 = vld [vmem:[%s3 + $0x8] sm:$0xf]
  %v336 = vld [vmem:[%s3 + $0xc] sm:$0xf]
  %v337 = vld [vmem:[%s4] sm:$0x1]
  %v339 = vlaneseq
  %v340 = vshrl.u32 %v339, 7
  %v341 = vsub.s32 0, %v340
  %v342 = vrot.slane %v337, %v341
  %v348 = vunpack.c.l.b16 %v333
  %v349 = vunpack.c.l.b16 %v334
  %v350 = vunpack.c.l.b16 %v335
  %v351 = vunpack.c.l.b16 %v336
  %v352 = vpack.c.b16 %v349, %v348
  %v353 = vpack.c.b16 %v351, %v350
  %vm356 = vcmask 261120
  %v358 = vsel %vm356, %v332, 0
  %360 = vmatprep.subr.bf16.mxu0 0
  %361 = vmatpush1.bf16.msra.mxu0 %v352
  %362 = vmatprep.subr.bf16.mxu0 0
  %363 = vmatpush1.bf16.msra.mxu0 %v353
  %364 = vmatprep.subr.bf16.mxu0 0
  %365 = vmatpush1.bf16.msra.mxu0 0
  %366 = vmatprep.subr.bf16.mxu0 0
  %367 = vmatpush1.bf16.msra.mxu0 0
  %368 = vmatprep.subr.bf16.mxu0 0
  %369 = vmatpush1.bf16.msra.mxu0 0
  %370 = vmatprep.subr.bf16.mxu0 0
  %371 = vmatpush1.bf16.msra.mxu0 0
  %372 = vmatprep.subr.bf16.mxu0 0
  %373 = vmatpush1.bf16.msra.mxu0 0
  %374 = vmatprep.subr.bf16.mxu0 0
  %375 = vmatpush1.bf16.msra.mxu0 0
  %376 = vmatprep.subr.bf16.mxu0 0
  %377 = vmatpush1.bf16.msra.mxu0 0
  %378 = vmatprep.subr.bf16.mxu0 0
  %379 = vmatpush1.bf16.msra.mxu0 0
  %380 = vmatprep.subr.bf16.mxu0 0
  %381 = vmatpush1.bf16.msra.mxu0 0
  %382 = vmatprep.subr.bf16.mxu0 0
  %383 = vmatpush1.bf16.msra.mxu0 0
  %384 = vmatprep.subr.bf16.mxu0 0
  %385 = vmatpush1.bf16.msra.mxu0 0
  %386 = vmatprep.subr.bf16.mxu0 0
  %387 = vmatpush1.bf16.msra.mxu0 0
  %388 = vmatprep.subr.bf16.mxu0 0
  %389 = vmatpush1.bf16.msra.mxu0 0
  %390 = vmatprep.subr.bf16.mxu0 0
  %391 = vmatpush1.bf16.msra.mxu0 0
  %392 = vmatprep.mubr.bf16.mxu0 0
  %393 = vmatmul.mubr.bf16.gmra.mrb[0].mxu0 %v358
  %v394 = vpop.f32.mrb[0].mxu0
  %v395 = vadd.f32 %v342, %v394
  %v396 = vpop.f32.mrb[0].mxu0
  %v397 = vpop.f32.mrb[0].mxu0
  %v398 = vadd.f32 %v342, %v397
  %v399 = vpop.f32.mrb[0].mxu0
  %400 = vdwg.mxu0
  %vm401 = vcmask 64512
  %402 = vst.msk [vmem:[%s5] sm:$0xff] %vm401, %v395
  %403 = vst.msk [vmem:[%s5 + $0x8] sm:$0xff] %vm401, %v398
  // Predicated region
  $region22: #{simple_mle_forward.1} parent=0 // pred_check
    _
  $region23: #{simple_mle_forward.1} parent=0 // pred_check_branch
    %405 = sbr.rel (0) target = $region25
  $region24: #{simple_mle_forward.1} parent=0 // pred_region
    _
  $region25: #{simple_mle_forward.1} parent=0 // pred_fallthru
    _
  // Predicated region
  $region26: #{simple_mle_forward.1} parent=0 // pred_check
    _
  $region27: #{simple_mle_forward.1} parent=0 // pred_check_branch
    %407 = sbr.rel (0) target = $region29
  $region28: #{simple_mle_forward.1} parent=0 // pred_region
    _
  $region29: #{simple_mle_forward.1} parent=0 // pred_fallthru
    _

</llo_original>
